<compile_context>
chip_gen: v5e
topology: v5e:2x2
jax: 0.10.0
libtpu: 0.0.40
codegen_flags: <defaults>
</compile_context>

<pallas_src>
import functools

import jax
import jax.numpy as jnp
import numpy as np
from jax.experimental import pallas as pl
from jax.experimental.pallas import tpu as pltpu


def _segment_dims(irreps_head):
    """irreps_head is a sequence of (multiplicity, l); e3nn ir.dim == 2*l + 1."""
    return [mul * (2 * l + 1) for (mul, l) in irreps_head]


def _heads2vec_kernel(x_ref, o_ref, *, seg_offsets, num_heads, head_dim):
    """x_ref: [tile_n, H*D] (head-major flatten of [tile_n, H, D]) -> o_ref: [tile_n, H*D].

    out[:, out_off_s + h*d_s + j] = x[:, h*D + in_off_s + j]
    All offsets are static: the output tile is assembled from static lane
    slices of the input ref and stored once (single full-width store).
    """
    parts = []
    for (in_off, d) in seg_offsets:            # segment-major output order
        for h in range(num_heads):             # head-minor inside each segment
            start = h * head_dim + in_off
            parts.append(x_ref[:, start:start + d])
    o_ref[...] = jnp.concatenate(parts, axis=-1) if len(parts) > 1 else parts[0]


def _pick_tile_n(n_rows, row_bytes):
    """Pick tile rows from a VMEM budget.

    One (input + output) block pair is kept <= ~4 MiB so the double-buffered
    pipeline stays well under v7x's 32 MiB scoped-VMEM default (and far under
    v5e/v6e's 128 MiB), while being large enough (hundreds-to-thousands of
    rows) to amortize the ~0.35 us per-grid-step overhead.
    """
    budget_bytes = 4 << 20
    t = budget_bytes // max(2 * row_bytes, 1)
    t = min(int(t), 2048)            # diminishing returns past ~1-2K rows
    t = max((t // 8) * 8, 8)         # sublane-aligned
    return t


def attn_heads2vec(x, irreps_head, *, tile_n=None):
    """Pallas equivalent of AttnHeads2Vec(irreps_head)(x) for x of shape [N, H, D]."""
    N, H, D = x.shape
    seg_dims = _segment_dims(irreps_head)
    if sum(seg_dims) != D:
        raise ValueError("irreps_head does not match the per-head feature dim")

    seg_offsets, off = [], 0
    for d in seg_dims:
        seg_offsets.append((off, d))
        off += d

    out_cols = H * D
    itemsize = jnp.dtype(x.dtype).itemsize

    # Flatten to 2-D in the wrapper: contiguous, free, and puts nodes on
    # sublanes / features on lanes inside the kernel.
    x2 = x.reshape(N, out_cols)

    if tile_n is None:
        tile_n = _pick_tile_n(N, out_cols * itemsize)
    tile_n = int(tile_n)
    if tile_n >= N:
        tile_n = N                   # full-extent block: any N is allowed
    elif tile_n < 8 or tile_n % 8 != 0:
        raise ValueError("tile_n must be a multiple of 8 (or >= N)")

    grid = (pl.cdiv(N, tile_n),)     # ragged last block is masked by Pallas

    kernel = functools.partial(
        _heads2vec_kernel, seg_offsets=tuple(seg_offsets),
        num_heads=H, head_dim=D)

    return pl.pallas_call(
        kernel,
        out_shape=jax.ShapeDtypeStruct((N, out_cols), x.dtype),
        grid=grid,
        in_specs=[pl.BlockSpec((tile_n, out_cols), lambda i: (i, 0))],
        out_specs=pl.BlockSpec((tile_n, out_cols), lambda i: (i, 0)),
        compiler_params=pltpu.CompilerParams(
            dimension_semantics=("parallel",)),
        cost_estimate=pl.CostEstimate(
            flops=0, transcendentals=0,
            bytes_accessed=2 * N * out_cols * itemsize),
    )(x2)


def attn_heads2vec_module_dict(x_dict, irreps_head_dict, *, tile_n=None):
    """Forward pass of AttnHeads2VecModuleDict."""
    # TODO(synk): keys with identical (H, irreps_head) could be stacked along N
    # into one launch, and very small keys (a few KiB) could fall back to plain
    # XLA reshape+concat to skip per-call overhead; kept per-key Pallas here.
    return {k: attn_heads2vec(v, irreps_head_dict[k], tile_n=tile_n)
            for k, v in x_dict.items()}


def _reference_heads2vec(x, seg_dims):
    """Pure-numpy reference mirroring torch AttnHeads2Vec.forward (narrow+reshape+cat)."""
    N, H, _ = x.shape
    outs, s = [], 0
    for d in seg_dims:
        outs.append(x[:, :, s:s + d].reshape(N, H * d))
        s += d
    return np.concatenate(outs, axis=1)


if __name__ == "__main__":
    key = jax.random.PRNGKey(0)

    # Two heterogeneous node types with different head irreps / head counts.
    #   "atom": 4 heads of 8x0e + 4x1e  (head dim = 8 + 12 = 20), N = 200 nodes
    #   "cell": 2 heads of 4x0e + 2x1e  (head dim = 4 +  6 = 10), N =  96 nodes
    irreps_head_dict = {
        "atom": ((8, 0), (4, 1)),
        "cell": ((4, 0), (2, 1)),
    }
    num_heads_dict = {"atom": 4, "cell": 2}
    num_nodes_dict = {"atom": 200, "cell": 96}

    x_dict = {}
    for k in irreps_head_dict:
        key, sub = jax.random.split(key)
        D = sum(_segment_dims(irreps_head_dict[k]))
        x_dict[k] = jax.random.normal(
            sub, (num_nodes_dict[k], num_heads_dict[k], D), dtype=jnp.float32)

    refs = {k: _reference_heads2vec(np.asarray(v),
                                    _segment_dims(irreps_head_dict[k]))
            for k, v in x_dict.items()}

    # 1) Default (VMEM-budgeted) tile selection -- single full-extent tile at
    #    these small demo sizes.
    out_dict = jax.block_until_ready(
        attn_heads2vec_module_dict(x_dict, irreps_head_dict))
    for k in x_dict:
        assert out_dict[k].shape == refs[k].shape
        np.testing.assert_array_equal(np.asarray(out_dict[k]), refs[k])

    # 2) Explicit multi-tile grids: ragged last block on "atom" (200 = 3*64 + 8)
    #    and an exactly-dividing grid on "cell" (96 = 2*48).
    out_a = jax.block_until_ready(
        attn_heads2vec(x_dict["atom"], irreps_head_dict["atom"], tile_n=64))
    np.testing.assert_array_equal(np.asarray(out_a), refs["atom"])
    out_c = jax.block_until_ready(
        attn_heads2vec(x_dict["cell"], irreps_head_dict["cell"], tile_n=48))
    np.testing.assert_array_equal(np.asarray(out_c), refs["cell"])

    print("KERNEL_OK")
</pallas_src>

<mosaic_0001>
module attributes {stable_mosaic.version = 11 : i64} {
  func.func @_heads2vec_kernel(%arg0: i32, %arg1: memref<200x80xf32, #tpu.memory_space<vmem>>, %arg2: memref<200x80xf32, #tpu.memory_space<vmem>>) attributes {dimension_semantics = [#tpu.dimension_semantics<parallel>], iteration_bounds = array<i64: 1>, scalar_prefetch = 0 : i64, scratch_operands = 0 : i64, tpu.core_type = #tpu.core_type<tc>, window_params = [{transform_indices = @transform_0, window_bounds = array<i64: 200, 80>}, {transform_indices = @transform_1, window_bounds = array<i64: 200, 80>}]} {
    %c0 = arith.constant 0 : index
    %c0_0 = arith.constant 0 : index
    %0 = vector.load %arg1[%c0, %c0_0] : memref<200x80xf32, #tpu.memory_space<vmem>>, vector<200x8xf32>
    %c0_1 = arith.constant 0 : index
    %c20 = arith.constant 20 : index
    %1 = vector.load %arg1[%c0_1, %c20] : memref<200x80xf32, #tpu.memory_space<vmem>>, vector<200x8xf32>
    %c0_2 = arith.constant 0 : index
    %c40 = arith.constant 40 : index
    %2 = vector.load %arg1[%c0_2, %c40] : memref<200x80xf32, #tpu.memory_space<vmem>>, vector<200x8xf32>
    %c0_3 = arith.constant 0 : index
    %c60 = arith.constant 60 : index
    %3 = vector.load %arg1[%c0_3, %c60] : memref<200x80xf32, #tpu.memory_space<vmem>>, vector<200x8xf32>
    %c0_4 = arith.constant 0 : index
    %c8 = arith.constant 8 : index
    %4 = vector.load %arg1[%c0_4, %c8] : memref<200x80xf32, #tpu.memory_space<vmem>>, vector<200x12xf32>
    %c0_5 = arith.constant 0 : index
    %c28 = arith.constant 28 : index
    %5 = vector.load %arg1[%c0_5, %c28] : memref<200x80xf32, #tpu.memory_space<vmem>>, vector<200x12xf32>
    %c0_6 = arith.constant 0 : index
    %c48 = arith.constant 48 : index
    %6 = vector.load %arg1[%c0_6, %c48] : memref<200x80xf32, #tpu.memory_space<vmem>>, vector<200x12xf32>
    %c0_7 = arith.constant 0 : index
    %c68 = arith.constant 68 : index
    %7 = vector.load %arg1[%c0_7, %c68] : memref<200x80xf32, #tpu.memory_space<vmem>>, vector<200x12xf32>
    %8 = tpu.concatenate %0, %1, %2, %3, %4, %5, %6, %7 in 1 : vector<200x8xf32>, vector<200x8xf32>, vector<200x8xf32>, vector<200x8xf32>, vector<200x12xf32>, vector<200x12xf32>, vector<200x12xf32>, vector<200x12xf32> -> vector<200x80xf32>
    %c0_8 = arith.constant 0 : index
    %c0_9 = arith.constant 0 : index
    %9 = vector.load %arg2[%c0_8, %c0_9] : memref<200x80xf32, #tpu.memory_space<vmem>>, vector<200x80xf32>
    tpu.vector_store %arg2[%c0_8, %c0_9], %8 {strides = array<i32>} : memref<200x80xf32, #tpu.memory_space<vmem>>, vector<200x80xf32>,
    return
  }
  func.func @transform_0(%arg0: i32) -> (i32, i32) {
    %c0_i32 = arith.constant 0 : i32
    %c0_i32_0 = arith.constant 0 : i32
    return %arg0, %c0_i32 : i32, i32
  }
  func.func @transform_1(%arg0: i32) -> (i32, i32) {
    %c0_i32 = arith.constant 0 : i32
    %c0_i32_0 = arith.constant 0 : i32
    return %arg0, %c0_i32 : i32, i32
  }
}

</mosaic_0001>

<llo_original>
// kernel: tpu_custom_call.1
$region0: #{tpu_custom_call.1}
  #allocation0 [shape = 'u32[]', space=smem, size = 0x4, offset = 0x4, fixed_abs, tag = 'smem constant byte address 0x4 - core index']
  #allocation1 [shape = 'u32[72,128]{1,0:T(1,128)}', space=vmem, size = 0x9000, scoped, tag = 'internal scratch']
  %s0 = inlined_call_operand.vmem [shape: f32[200,80], index: 0, kind: input, shape index: {}]
  %s1 = inlined_call_operand.vmem [shape: f32[200,80], index: 1, kind: output, shape index: {}]
  %s2 = sld [smem:[#allocation0]]
  $region14: #{tpu_custom_call.1} parent=0
    _
  %s4 = ssub.s32 1, %s2
  %s5 = scalar_select 0, %s4, %s2
  // Predicated region
  $region2: #{tpu_custom_call.1} parent=0 // pred_check
    _
  $region3: #{tpu_custom_call.1} parent=0 // pred_check_branch
    %7 = sbr.rel (0) target = $region5
  $region4: #{tpu_custom_call.1} parent=0 // pred_region
    _
  $region5: #{tpu_custom_call.1} parent=0 // pred_fallthru
    _
  %v8 = vld [vmem:[%s0] sm:$0xff]
  %v9 = vld [vmem:[%s0 + $0x8] sm:$0xff]
  %v10 = vld [vmem:[%s0 + $0x10] sm:$0xff]
  %v11 = vld [vmem:[%s0 + $0x18] sm:$0xff]
  %v12 = vld [vmem:[%s0 + $0x20] sm:$0xff]
  %v13 = vld [vmem:[%s0 + $0x28] sm:$0xff]
  %v14 = vld [vmem:[%s0 + $0x30] sm:$0xff]
  %v15 = vld [vmem:[%s0 + $0x38] sm:$0xff]
  %v16 = vld [vmem:[%s0 + $0x40] sm:$0xff]
  %v17 = vld [vmem:[%s0 + $0x48] sm:$0xff]
  %v18 = vld [vmem:[%s0 + $0x50] sm:$0xff]
  %v19 = vld [vmem:[%s0 + $0x58] sm:$0xff]
  %v20 = vld [vmem:[%s0 + $0x60] sm:$0xff]
  %v21 = vld [vmem:[%s0 + $0x68] sm:$0xff]
  %v22 = vld [vmem:[%s0 + $0x70] sm:$0xff]
  %v23 = vld [vmem:[%s0 + $0x78] sm:$0xff]
  %v24 = vld [vmem:[%s0 + $0x80] sm:$0xff]
  %v25 = vld [vmem:[%s0 + $0x88] sm:$0xff]
  %v26 = vld [vmem:[%s0 + $0x90] sm:$0xff]
  %v27 = vld [vmem:[%s0 + $0x98] sm:$0xff]
  %v28 = vld [vmem:[%s0 + $0xa0] sm:$0xff]
  %v29 = vld [vmem:[%s0 + $0xa8] sm:$0xff]
  %v30 = vld [vmem:[%s0 + $0xb0] sm:$0xff]
  %v31 = vld [vmem:[%s0 + $0xb8] sm:$0xff]
  %v32 = vld [vmem:[%s0 + $0xc0] sm:$0xff]
  %58 = vrot.lane.b32.xlu0 %v8, 116
  %v59 = vpop.permute.xlu0 %58
  %60 = vrot.lane.b32.xlu0 %v9, 116
  %v61 = vpop.permute.xlu0 %60
  %62 = vrot.lane.b32.xlu0 %v10, 116
  %v63 = vpop.permute.xlu0 %62
  %64 = vrot.lane.b32.xlu0 %v11, 116
  %v65 = vpop.permute.xlu0 %64
  %66 = vrot.lane.b32.xlu0 %v12, 116
  %v67 = vpop.permute.xlu0 %66
  %68 = vrot.lane.b32.xlu0 %v13, 116
  %v69 = vpop.permute.xlu0 %68
  %70 = vrot.lane.b32.xlu0 %v14, 116
  %v71 = vpop.permute.xlu0 %70
  %72 = vrot.lane.b32.xlu0 %v15, 116
  %v73 = vpop.permute.xlu0 %72
  %74 = vrot.lane.b32.xlu0 %v16, 116
  %v75 = vpop.permute.xlu0 %74
  %76 = vrot.lane.b32.xlu0 %v17, 116
  %v77 = vpop.permute.xlu0 %76
  %78 = vrot.lane.b32.xlu0 %v18, 116
  %v79 = vpop.permute.xlu0 %78
  %80 = vrot.lane.b32.xlu0 %v19, 116
  %v81 = vpop.permute.xlu0 %80
  %82 = vrot.lane.b32.xlu0 %v20, 116
  %v83 = vpop.permute.xlu0 %82
  %84 = vrot.lane.b32.xlu0 %v21, 116
  %v85 = vpop.permute.xlu0 %84
  %86 = vrot.lane.b32.xlu0 %v22, 116
  %v87 = vpop.permute.xlu0 %86
  %88 = vrot.lane.b32.xlu0 %v23, 116
  %v89 = vpop.permute.xlu0 %88
  %90 = vrot.lane.b32.xlu0 %v24, 116
  %v91 = vpop.permute.xlu0 %90
  %92 = vrot.lane.b32.xlu0 %v25, 116
  %v93 = vpop.permute.xlu0 %92
  %94 = vrot.lane.b32.xlu0 %v26, 116
  %v95 = vpop.permute.xlu0 %94
  %96 = vrot.lane.b32.xlu0 %v27, 116
  %v97 = vpop.permute.xlu0 %96
  %98 = vrot.lane.b32.xlu0 %v28, 116
  %v99 = vpop.permute.xlu0 %98
  %100 = vrot.lane.b32.xlu0 %v29, 116
  %v101 = vpop.permute.xlu0 %100
  %102 = vrot.lane.b32.xlu0 %v30, 116
  %v103 = vpop.permute.xlu0 %102
  %104 = vrot.lane.b32.xlu0 %v31, 116
  %v105 = vpop.permute.xlu0 %104
  %106 = vrot.lane.b32.xlu0 %v32, 116
  %v107 = vpop.permute.xlu0 %106
  %133 = vrot.lane.b32.xlu0 %v8, 104
  %v134 = vpop.permute.xlu0 %133
  %135 = vrot.lane.b32.xlu0 %v9, 104
  %v136 = vpop.permute.xlu0 %135
  %137 = vrot.lane.b32.xlu0 %v10, 104
  %v138 = vpop.permute.xlu0 %137
  %139 = vrot.lane.b32.xlu0 %v11, 104
  %v140 = vpop.permute.xlu0 %139
  %141 = vrot.lane.b32.xlu0 %v12, 104
  %v142 = vpop.permute.xlu0 %141
  %143 = vrot.lane.b32.xlu0 %v13, 104
  %v144 = vpop.permute.xlu0 %143
  %145 = vrot.lane.b32.xlu0 %v14, 104
  %v146 = vpop.permute.xlu0 %145
  %147 = vrot.lane.b32.xlu0 %v15, 104
  %v148 = vpop.permute.xlu0 %147
  %149 = vrot.lane.b32.xlu0 %v16, 104
  %v150 = vpop.permute.xlu0 %149
  %151 = vrot.lane.b32.xlu0 %v17, 104
  %v152 = vpop.permute.xlu0 %151
  %153 = vrot.lane.b32.xlu0 %v18, 104
  %v154 = vpop.permute.xlu0 %153
  %155 = vrot.lane.b32.xlu0 %v19, 104
  %v156 = vpop.permute.xlu0 %155
  %157 = vrot.lane.b32.xlu0 %v20, 104
  %v158 = vpop.permute.xlu0 %157
  %159 = vrot.lane.b32.xlu0 %v21, 104
  %v160 = vpop.permute.xlu0 %159
  %161 = vrot.lane.b32.xlu0 %v22, 104
  %v162 = vpop.permute.xlu0 %161
  %163 = vrot.lane.b32.xlu0 %v23, 104
  %v164 = vpop.permute.xlu0 %163
  %165 = vrot.lane.b32.xlu0 %v24, 104
  %v166 = vpop.permute.xlu0 %165
  %167 = vrot.lane.b32.xlu0 %v25, 104
  %v168 = vpop.permute.xlu0 %167
  %169 = vrot.lane.b32.xlu0 %v26, 104
  %v170 = vpop.permute.xlu0 %169
  %171 = vrot.lane.b32.xlu0 %v27, 104
  %v172 = vpop.permute.xlu0 %171
  %173 = vrot.lane.b32.xlu0 %v28, 104
  %v174 = vpop.permute.xlu0 %173
  %175 = vrot.lane.b32.xlu0 %v29, 104
  %v176 = vpop.permute.xlu0 %175
  %177 = vrot.lane.b32.xlu0 %v30, 104
  %v178 = vpop.permute.xlu0 %177
  %179 = vrot.lane.b32.xlu0 %v31, 104
  %v180 = vpop.permute.xlu0 %179
  %181 = vrot.lane.b32.xlu0 %v32, 104
  %v182 = vpop.permute.xlu0 %181
  %208 = vrot.lane.b32.xlu0 %v8, 92
  %v209 = vpop.permute.xlu0 %208
  %210 = vrot.lane.b32.xlu0 %v9, 92
  %v211 = vpop.permute.xlu0 %210
  %212 = vrot.lane.b32.xlu0 %v10, 92
  %v213 = vpop.permute.xlu0 %212
  %214 = vrot.lane.b32.xlu0 %v11, 92
  %v215 = vpop.permute.xlu0 %214
  %216 = vrot.lane.b32.xlu0 %v12, 92
  %v217 = vpop.permute.xlu0 %216
  %218 = vrot.lane.b32.xlu0 %v13, 92
  %v219 = vpop.permute.xlu0 %218
  %220 = vrot.lane.b32.xlu0 %v14, 92
  %v221 = vpop.permute.xlu0 %220
  %222 = vrot.lane.b32.xlu0 %v15, 92
  %v223 = vpop.permute.xlu0 %222
  %224 = vrot.lane.b32.xlu0 %v16, 92
  %v225 = vpop.permute.xlu0 %224
  %226 = vrot.lane.b32.xlu0 %v17, 92
  %v227 = vpop.permute.xlu0 %226
  %228 = vrot.lane.b32.xlu0 %v18, 92
  %v229 = vpop.permute.xlu0 %228
  %230 = vrot.lane.b32.xlu0 %v19, 92
  %v231 = vpop.permute.xlu0 %230
  %232 = vrot.lane.b32.xlu0 %v20, 92
  %v233 = vpop.permute.xlu0 %232
  %234 = vrot.lane.b32.xlu0 %v21, 92
  %v235 = vpop.permute.xlu0 %234
  %236 = vrot.lane.b32.xlu0 %v22, 92
  %v237 = vpop.permute.xlu0 %236
  %238 = vrot.lane.b32.xlu0 %v23, 92
  %v239 = vpop.permute.xlu0 %238
  %240 = vrot.lane.b32.xlu0 %v24, 92
  %v241 = vpop.permute.xlu0 %240
  %242 = vrot.lane.b32.xlu0 %v25, 92
  %v243 = vpop.permute.xlu0 %242
  %244 = vrot.lane.b32.xlu0 %v26, 92
  %v245 = vpop.permute.xlu0 %244
  %246 = vrot.lane.b32.xlu0 %v27, 92
  %v247 = vpop.permute.xlu0 %246
  %248 = vrot.lane.b32.xlu0 %v28, 92
  %v249 = vpop.permute.xlu0 %248
  %250 = vrot.lane.b32.xlu0 %v29, 92
  %v251 = vpop.permute.xlu0 %250
  %252 = vrot.lane.b32.xlu0 %v30, 92
  %v253 = vpop.permute.xlu0 %252
  %254 = vrot.lane.b32.xlu0 %v31, 92
  %v255 = vpop.permute.xlu0 %254
  %256 = vrot.lane.b32.xlu0 %v32, 92
  %v257 = vpop.permute.xlu0 %256
  %283 = vrot.lane.b32.xlu0 %v8, 24
  %v284 = vpop.permute.xlu0 %283
  %285 = vrot.lane.b32.xlu0 %v9, 24
  %v286 = vpop.permute.xlu0 %285
  %287 = vrot.lane.b32.xlu0 %v10, 24
  %v288 = vpop.permute.xlu0 %287
  %289 = vrot.lane.b32.xlu0 %v11, 24
  %v290 = vpop.permute.xlu0 %289
  %291 = vrot.lane.b32.xlu0 %v12, 24
  %v292 = vpop.permute.xlu0 %291
  %293 = vrot.lane.b32.xlu0 %v13, 24
  %v294 = vpop.permute.xlu0 %293
  %295 = vrot.lane.b32.xlu0 %v14, 24
  %v296 = vpop.permute.xlu0 %295
  %297 = vrot.lane.b32.xlu0 %v15, 24
  %v298 = vpop.permute.xlu0 %297
  %299 = vrot.lane.b32.xlu0 %v16, 24
  %v300 = vpop.permute.xlu0 %299
  %301 = vrot.lane.b32.xlu0 %v17, 24
  %v302 = vpop.permute.xlu0 %301
  %303 = vrot.lane.b32.xlu0 %v18, 24
  %v304 = vpop.permute.xlu0 %303
  %305 = vrot.lane.b32.xlu0 %v19, 24
  %v306 = vpop.permute.xlu0 %305
  %307 = vrot.lane.b32.xlu0 %v20, 24
  %v308 = vpop.permute.xlu0 %307
  %309 = vrot.lane.b32.xlu0 %v21, 24
  %v310 = vpop.permute.xlu0 %309
  %311 = vrot.lane.b32.xlu0 %v22, 24
  %v312 = vpop.permute.xlu0 %311
  %313 = vrot.lane.b32.xlu0 %v23, 24
  %v314 = vpop.permute.xlu0 %313
  %315 = vrot.lane.b32.xlu0 %v24, 24
  %v316 = vpop.permute.xlu0 %315
  %317 = vrot.lane.b32.xlu0 %v25, 24
  %v318 = vpop.permute.xlu0 %317
  %319 = vrot.lane.b32.xlu0 %v26, 24
  %v320 = vpop.permute.xlu0 %319
  %321 = vrot.lane.b32.xlu0 %v27, 24
  %v322 = vpop.permute.xlu0 %321
  %323 = vrot.lane.b32.xlu0 %v28, 24
  %v324 = vpop.permute.xlu0 %323
  %325 = vrot.lane.b32.xlu0 %v29, 24
  %v326 = vpop.permute.xlu0 %325
  %327 = vrot.lane.b32.xlu0 %v30, 24
  %v328 = vpop.permute.xlu0 %327
  %329 = vrot.lane.b32.xlu0 %v31, 24
  %v330 = vpop.permute.xlu0 %329
  %331 = vrot.lane.b32.xlu0 %v32, 24
  %v332 = vpop.permute.xlu0 %331
  %358 = vrot.lane.b32.xlu0 %v8, 16
  %v359 = vpop.permute.xlu0 %358
  %360 = vrot.lane.b32.xlu0 %v9, 16
  %v361 = vpop.permute.xlu0 %360
  %362 = vrot.lane.b32.xlu0 %v10, 16
  %v363 = vpop.permute.xlu0 %362
  %364 = vrot.lane.b32.xlu0 %v11, 16
  %v365 = vpop.permute.xlu0 %364
  %366 = vrot.lane.b32.xlu0 %v12, 16
  %v367 = vpop.permute.xlu0 %366
  %368 = vrot.lane.b32.xlu0 %v13, 16
  %v369 = vpop.permute.xlu0 %368
  %370 = vrot.lane.b32.xlu0 %v14, 16
  %v371 = vpop.permute.xlu0 %370
  %372 = vrot.lane.b32.xlu0 %v15, 16
  %v373 = vpop.permute.xlu0 %372
  %374 = vrot.lane.b32.xlu0 %v16, 16
  %v375 = vpop.permute.xlu0 %374
  %376 = vrot.lane.b32.xlu0 %v17, 16
  %v377 = vpop.permute.xlu0 %376
  %378 = vrot.lane.b32.xlu0 %v18, 16
  %v379 = vpop.permute.xlu0 %378
  %380 = vrot.lane.b32.xlu0 %v19, 16
  %v381 = vpop.permute.xlu0 %380
  %382 = vrot.lane.b32.xlu0 %v20, 16
  %v383 = vpop.permute.xlu0 %382
  %384 = vrot.lane.b32.xlu0 %v21, 16
  %v385 = vpop.permute.xlu0 %384
  %386 = vrot.lane.b32.xlu0 %v22, 16
  %v387 = vpop.permute.xlu0 %386
  %388 = vrot.lane.b32.xlu0 %v23, 16
  %v389 = vpop.permute.xlu0 %388
  %390 = vrot.lane.b32.xlu0 %v24, 16
  %v391 = vpop.permute.xlu0 %390
  %392 = vrot.lane.b32.xlu0 %v25, 16
  %v393 = vpop.permute.xlu0 %392
  %394 = vrot.lane.b32.xlu0 %v26, 16
  %v395 = vpop.permute.xlu0 %394
  %396 = vrot.lane.b32.xlu0 %v27, 16
  %v397 = vpop.permute.xlu0 %396
  %398 = vrot.lane.b32.xlu0 %v28, 16
  %v399 = vpop.permute.xlu0 %398
  %400 = vrot.lane.b32.xlu0 %v29, 16
  %v401 = vpop.permute.xlu0 %400
  %402 = vrot.lane.b32.xlu0 %v30, 16
  %v403 = vpop.permute.xlu0 %402
  %404 = vrot.lane.b32.xlu0 %v31, 16
  %v405 = vpop.permute.xlu0 %404
  %406 = vrot.lane.b32.xlu0 %v32, 16
  %v407 = vpop.permute.xlu0 %406
  %433 = vrot.lane.b32.xlu0 %v8, 8
  %v434 = vpop.permute.xlu0 %433
  %435 = vrot.lane.b32.xlu0 %v9, 8
  %v436 = vpop.permute.xlu0 %435
  %437 = vrot.lane.b32.xlu0 %v10, 8
  %v438 = vpop.permute.xlu0 %437
  %439 = vrot.lane.b32.xlu0 %v11, 8
  %v440 = vpop.permute.xlu0 %439
  %441 = vrot.lane.b32.xlu0 %v12, 8
  %v442 = vpop.permute.xlu0 %441
  %443 = vrot.lane.b32.xlu0 %v13, 8
  %v444 = vpop.permute.xlu0 %443
  %445 = vrot.lane.b32.xlu0 %v14, 8
  %v446 = vpop.permute.xlu0 %445
  %447 = vrot.lane.b32.xlu0 %v15, 8
  %v448 = vpop.permute.xlu0 %447
  %449 = vrot.lane.b32.xlu0 %v16, 8
  %v450 = vpop.permute.xlu0 %449
  %451 = vrot.lane.b32.xlu0 %v17, 8
  %v452 = vpop.permute.xlu0 %451
  %453 = vrot.lane.b32.xlu0 %v18, 8
  %v454 = vpop.permute.xlu0 %453
  %455 = vrot.lane.b32.xlu0 %v19, 8
  %v456 = vpop.permute.xlu0 %455
  %457 = vrot.lane.b32.xlu0 %v20, 8
  %v458 = vpop.permute.xlu0 %457
  %459 = vrot.lane.b32.xlu0 %v21, 8
  %v460 = vpop.permute.xlu0 %459
  %461 = vrot.lane.b32.xlu0 %v22, 8
  %v462 = vpop.permute.xlu0 %461
  %463 = vrot.lane.b32.xlu0 %v23, 8
  %v464 = vpop.permute.xlu0 %463
  %465 = vrot.lane.b32.xlu0 %v24, 8
  %v466 = vpop.permute.xlu0 %465
  %467 = vrot.lane.b32.xlu0 %v25, 8
  %v468 = vpop.permute.xlu0 %467
  %469 = vrot.lane.b32.xlu0 %v26, 8
  %v470 = vpop.permute.xlu0 %469
  %471 = vrot.lane.b32.xlu0 %v27, 8
  %v472 = vpop.permute.xlu0 %471
  %473 = vrot.lane.b32.xlu0 %v28, 8
  %v474 = vpop.permute.xlu0 %473
  %475 = vrot.lane.b32.xlu0 %v29, 8
  %v476 = vpop.permute.xlu0 %475
  %477 = vrot.lane.b32.xlu0 %v30, 8
  %v478 = vpop.permute.xlu0 %477
  %479 = vrot.lane.b32.xlu0 %v31, 8
  %v480 = vpop.permute.xlu0 %479
  %481 = vrot.lane.b32.xlu0 %v32, 8
  %v482 = vpop.permute.xlu0 %481
  %vm508 = vcmask 64512
  %v509 = vsel %vm508, %v8, %v59
  %v510 = vsel %vm508, %v9, %v61
  %v511 = vsel %vm508, %v10, %v63
  %v512 = vsel %vm508, %v11, %v65
  %v513 = vsel %vm508, %v12, %v67
  %v514 = vsel %vm508, %v13, %v69
  %v515 = vsel %vm508, %v14, %v71
  %v516 = vsel %vm508, %v15, %v73
  %v517 = vsel %vm508, %v16, %v75
  %v518 = vsel %vm508, %v17, %v77
  %v519 = vsel %vm508, %v18, %v79
  %v520 = vsel %vm508, %v19, %v81
  %v521 = vsel %vm508, %v20, %v83
  %v522 = vsel %vm508, %v21, %v85
  %v523 = vsel %vm508, %v22, %v87
  %v524 = vsel %vm508, %v23, %v89
  %v525 = vsel %vm508, %v24, %v91
  %v526 = vsel %vm508, %v25, %v93
  %v527 = vsel %vm508, %v26, %v95
  %v528 = vsel %vm508, %v27, %v97
  %v529 = vsel %vm508, %v28, %v99
  %v530 = vsel %vm508, %v29, %v101
  %v531 = vsel %vm508, %v30, %v103
  %v532 = vsel %vm508, %v31, %v105
  %v533 = vsel %vm508, %v32, %v107
  %vm534 = vcmask 130048
  %v535 = vsel %vm534, %v509, %v134
  %v536 = vsel %vm534, %v510, %v136
  %v537 = vsel %vm534, %v511, %v138
  %v538 = vsel %vm534, %v512, %v140
  %v539 = vsel %vm534, %v513, %v142
  %v540 = vsel %vm534, %v514, %v144
  %v541 = vsel %vm534, %v515, %v146
  %v542 = vsel %vm534, %v516, %v148
  %v543 = vsel %vm534, %v517, %v150
  %v544 = vsel %vm534, %v518, %v152
  %v545 = vsel %vm534, %v519, %v154
  %v546 = vsel %vm534, %v520, %v156
  %v547 = vsel %vm534, %v521, %v158
  %v548 = vsel %vm534, %v522, %v160
  %v549 = vsel %vm534, %v523, %v162
  %v550 = vsel %vm534, %v524, %v164
  %v551 = vsel %vm534, %v525, %v166
  %v552 = vsel %vm534, %v526, %v168
  %v553 = vsel %vm534, %v527, %v170
  %v554 = vsel %vm534, %v528, %v172
  %v555 = vsel %vm534, %v529, %v174
  %v556 = vsel %vm534, %v530, %v176
  %v557 = vsel %vm534, %v531, %v178
  %v558 = vsel %vm534, %v532, %v180
  %v559 = vsel %vm534, %v533, %v182
  %vm560 = vcmask 195584
  %v561 = vsel %vm560, %v535, %v209
  %v562 = vsel %vm560, %v536, %v211
  %v563 = vsel %vm560, %v537, %v213
  %v564 = vsel %vm560, %v538, %v215
  %v565 = vsel %vm560, %v539, %v217
  %v566 = vsel %vm560, %v540, %v219
  %v567 = vsel %vm560, %v541, %v221
  %v568 = vsel %vm560, %v542, %v223
  %v569 = vsel %vm560, %v543, %v225
  %v570 = vsel %vm560, %v544, %v227
  %v571 = vsel %vm560, %v545, %v229
  %v572 = vsel %vm560, %v546, %v231
  %v573 = vsel %vm560, %v547, %v233
  %v574 = vsel %vm560, %v548, %v235
  %v575 = vsel %vm560, %v549, %v237
  %v576 = vsel %vm560, %v550, %v239
  %v577 = vsel %vm560, %v551, %v241
  %v578 = vsel %vm560, %v552, %v243
  %v579 = vsel %vm560, %v553, %v245
  %v580 = vsel %vm560, %v554, %v247
  %v581 = vsel %vm560, %v555, %v249
  %v582 = vsel %vm560, %v556, %v251
  %v583 = vsel %vm560, %v557, %v253
  %v584 = vsel %vm560, %v558, %v255
  %v585 = vsel %vm560, %v559, %v257
  %vm586 = vcmask 261120
  %v587 = vsel %vm586, %v561, %v284
  %v588 = vsel %vm586, %v562, %v286
  %v589 = vsel %vm586, %v563, %v288
  %v590 = vsel %vm586, %v564, %v290
  %v591 = vsel %vm586, %v565, %v292
  %v592 = vsel %vm586, %v566, %v294
  %v593 = vsel %vm586, %v567, %v296
  %v594 = vsel %vm586, %v568, %v298
  %v595 = vsel %vm586, %v569, %v300
  %v596 = vsel %vm586, %v570, %v302
  %v597 = vsel %vm586, %v571, %v304
  %v598 = vsel %vm586, %v572, %v306
  %v599 = vsel %vm586, %v573, %v308
  %v600 = vsel %vm586, %v574, %v310
  %v601 = vsel %vm586, %v575, %v312
  %v602 = vsel %vm586, %v576, %v314
  %v603 = vsel %vm586, %v577, %v316
  %v604 = vsel %vm586, %v578, %v318
  %v605 = vsel %vm586, %v579, %v320
  %v606 = vsel %vm586, %v580, %v322
  %v607 = vsel %vm586, %v581, %v324
  %v608 = vsel %vm586, %v582, %v326
  %v609 = vsel %vm586, %v583, %v328
  %v610 = vsel %vm586, %v584, %v330
  %v611 = vsel %vm586, %v585, %v332
  %vm612 = vcmask 359424
  %v613 = vsel %vm612, %v587, %v359
  %v614 = vsel %vm612, %v588, %v361
  %v615 = vsel %vm612, %v589, %v363
  %v616 = vsel %vm612, %v590, %v365
  %v617 = vsel %vm612, %v591, %v367
  %v618 = vsel %vm612, %v592, %v369
  %v619 = vsel %vm612, %v593, %v371
  %v620 = vsel %vm612, %v594, %v373
  %v621 = vsel %vm612, %v595, %v375
  %v622 = vsel %vm612, %v596, %v377
  %v623 = vsel %vm612, %v597, %v379
  %v624 = vsel %vm612, %v598, %v381
  %v625 = vsel %vm612, %v599, %v383
  %v626 = vsel %vm612, %v600, %v385
  %v627 = vsel %vm612, %v601, %v387
  %v628 = vsel %vm612, %v602, %v389
  %v629 = vsel %vm612, %v603, %v391
  %v630 = vsel %vm612, %v604, %v393
  %v631 = vsel %vm612, %v605, %v395
  %v632 = vsel %vm612, %v606, %v397
  %v633 = vsel %vm612, %v607, %v399
  %v634 = vsel %vm612, %v608, %v401
  %v635 = vsel %vm612, %v609, %v403
  %v636 = vsel %vm612, %v610, %v405
  %v637 = vsel %vm612, %v611, %v407
  %vm638 = vcmask 457728
  %v639 = vsel %vm638, %v613, %v434
  %v640 = vsel %vm638, %v614, %v436
  %v641 = vsel %vm638, %v615, %v438
  %v642 = vsel %vm638, %v616, %v440
  %v643 = vsel %vm638, %v617, %v442
  %v644 = vsel %vm638, %v618, %v444
  %v645 = vsel %vm638, %v619, %v446
  %v646 = vsel %vm638, %v620, %v448
  %v647 = vsel %vm638, %v621, %v450
  %v648 = vsel %vm638, %v622, %v452
  %v649 = vsel %vm638, %v623, %v454
  %v650 = vsel %vm638, %v624, %v456
  %v651 = vsel %vm638, %v625, %v458
  %v652 = vsel %vm638, %v626, %v460
  %v653 = vsel %vm638, %v627, %v462
  %v654 = vsel %vm638, %v628, %v464
  %v655 = vsel %vm638, %v629, %v466
  %v656 = vsel %vm638, %v630, %v468
  %v657 = vsel %vm638, %v631, %v470
  %v658 = vsel %vm638, %v632, %v472
  %v659 = vsel %vm638, %v633, %v474
  %v660 = vsel %vm638, %v634, %v476
  %v661 = vsel %vm638, %v635, %v478
  %v662 = vsel %vm638, %v636, %v480
  %v663 = vsel %vm638, %v637, %v482
  %vm664 = vcmask 556032
  %v665 = vsel %vm664, %v639, %v8
  %v666 = vsel %vm664, %v640, %v9
  %v667 = vsel %vm664, %v641, %v10
  %v668 = vsel %vm664, %v642, %v11
  %v669 = vsel %vm664, %v643, %v12
  %v670 = vsel %vm664, %v644, %v13
  %v671 = vsel %vm664, %v645, %v14
  %v672 = vsel %vm664, %v646, %v15
  %v673 = vsel %vm664, %v647, %v16
  %v674 = vsel %vm664, %v648, %v17
  %v675 = vsel %vm664, %v649, %v18
  %v676 = vsel %vm664, %v650, %v19
  %v677 = vsel %vm664, %v651, %v20
  %v678 = vsel %vm664, %v652, %v21
  %v679 = vsel %vm664, %v653, %v22
  %v680 = vsel %vm664, %v654, %v23
  %v681 = vsel %vm664, %v655, %v24
  %v682 = vsel %vm664, %v656, %v25
  %v683 = vsel %vm664, %v657, %v26
  %v684 = vsel %vm664, %v658, %v27
  %v685 = vsel %vm664, %v659, %v28
  %v686 = vsel %vm664, %v660, %v29
  %v687 = vsel %vm664, %v661, %v30
  %v688 = vsel %vm664, %v662, %v31
  %v689 = vsel %vm664, %v663, %v32
  %vm690 = vcmask 654336
  %691 = vst.msk [vmem:[%s1] sm:$0xff] %vm690, %v665
  %692 = vst.msk [vmem:[%s1 + $0x8] sm:$0xff] %vm690, %v666
  %693 = vst.msk [vmem:[%s1 + $0x10] sm:$0xff] %vm690, %v667
  %694 = vst.msk [vmem:[%s1 + $0x18] sm:$0xff] %vm690, %v668
  %695 = vst.msk [vmem:[%s1 + $0x20] sm:$0xff] %vm690, %v669
  %696 = vst.msk [vmem:[%s1 + $0x28] sm:$0xff] %vm690, %v670
  %697 = vst.msk [vmem:[%s1 + $0x30] sm:$0xff] %vm690, %v671
  %698 = vst.msk [vmem:[%s1 + $0x38] sm:$0xff] %vm690, %v672
  %699 = vst.msk [vmem:[%s1 + $0x40] sm:$0xff] %vm690, %v673
  %700 = vst.msk [vmem:[%s1 + $0x48] sm:$0xff] %vm690, %v674
  %701 = vst.msk [vmem:[%s1 + $0x50] sm:$0xff] %vm690, %v675
  %702 = vst.msk [vmem:[%s1 + $0x58] sm:$0xff] %vm690, %v676
  %703 = vst.msk [vmem:[%s1 + $0x60] sm:$0xff] %vm690, %v677
  %704 = vst.msk [vmem:[%s1 + $0x68] sm:$0xff] %vm690, %v678
  %705 = vst.msk [vmem:[%s1 + $0x70] sm:$0xff] %vm690, %v679
  %706 = vst.msk [vmem:[%s1 + $0x78] sm:$0xff] %vm690, %v680
  %707 = vst.msk [vmem:[%s1 + $0x80] sm:$0xff] %vm690, %v681
  %708 = vst.msk [vmem:[%s1 + $0x88] sm:$0xff] %vm690, %v682
  %709 = vst.msk [vmem:[%s1 + $0x90] sm:$0xff] %vm690, %v683
  %710 = vst.msk [vmem:[%s1 + $0x98] sm:$0xff] %vm690, %v684
  %711 = vst.msk [vmem:[%s1 + $0xa0] sm:$0xff] %vm690, %v685
  %712 = vst.msk [vmem:[%s1 + $0xa8] sm:$0xff] %vm690, %v686
  %713 = vst.msk [vmem:[%s1 + $0xb0] sm:$0xff] %vm690, %v687
  %714 = vst.msk [vmem:[%s1 + $0xb8] sm:$0xff] %vm690, %v688
  %715 = vst.msk [vmem:[%s1 + $0xc0] sm:$0xff] %vm690, %v689
  // Predicated region
  $region6: #{tpu_custom_call.1} parent=0 // pred_check
    _
  $region7: #{tpu_custom_call.1} parent=0 // pred_check_branch
    %717 = sbr.rel (0) target = $region9
  $region8: #{tpu_custom_call.1} parent=0 // pred_region
    _
  $region9: #{tpu_custom_call.1} parent=0 // pred_fallthru
    _
  // Predicated region
  $region10: #{tpu_custom_call.1} parent=0 // pred_check
    _
  $region11: #{tpu_custom_call.1} parent=0 // pred_check_branch
    %719 = sbr.rel (0) target = $region13
  $region12: #{tpu_custom_call.1} parent=0 // pred_region
    _
  $region13: #{tpu_custom_call.1} parent=0 // pred_fallthru
    _

</llo_original>
